<compile_context>
chip_gen: v7x
topology: tpu7x:2x2x1
jax: 0.10.0
libtpu: 0.0.40
codegen_flags: <defaults>
</compile_context>

<pallas_src>
import functools

import jax
import jax.numpy as jnp
from jax.experimental import pallas as pl
from jax.experimental.pallas import tpu as pltpu

LANE = 128                  # TPU lane width: output features padded to a multiple of this
SUBLANE = 8                 # sublane granularity for the batch tile
TILE_B_CAP = 1024           # batch-tile cap (sweep 512/1024/2048); amortizes per-step overhead
VMEM_LIMIT_BYTES = 48 << 20 # explicit scoped-VMEM budget, safe on v5e/v6e (128 MiB) and v7x (64 MiB)


def _round_up(x, m):
    return (x + m - 1) // m * m


def _pick_tile_b(B, cap=TILE_B_CAP):
    """Pick the batch tile.

    Goals (in order):
      * big enough to amortize per-grid-step overhead (cap = TILE_B_CAP),
      * >= 2 tiles when the batch allows it, so the 'parallel' axis shards
        across both TensorCores on v7x (neutral on v5e/v6e),
      * a divisor of the sublane-rounded batch so no host-side jnp.pad copy
        of x (full HBM read+write) is needed.
    """
    B_r = _round_up(B, SUBLANE)
    if B_r >= 2 * SUBLANE:
        target = min(cap, _round_up(-(-B_r // 2), SUBLANE))  # aim for >= 2 tiles
    else:
        target = min(cap, B_r)
    if B == B_r:
        # largest multiple of SUBLANE <= target that divides B_r (always finds >= 8)
        for t in range(target, SUBLANE - 1, -SUBLANE):
            if B_r % t == 0:
                return t
    return target


def _mlp_kernel(num_hidden, x_ref, *refs):
    """Fused MLP kernel: one batch tile per grid step.

    refs = (w0, shift0, ..., w_{L-1}, shift_{L-1}, w_out, b_out, o_ref)
      w_i    : bf16 (prev, H), BN scale already folded in
      shift_i: f32  (1, H)     (Linear bias + BN shift folded)
    Hidden layer i: h = relu(f32_acc(h_bf16 @ w_i) + shift_i)
    Output:         o = f32_acc(h_bf16 @ w_out) + b_out   (lane-padded to 128 cols)
    """
    o_ref = refs[-1]
    p = refs[:-1]

    # bf16 MXU operands, f32 accumulation, f32 epilogue.
    h = x_ref[...].astype(jnp.bfloat16)
    for i in range(num_hidden):
        w = p[2 * i][...]                       # bf16 weights
        shift = p[2 * i + 1][...]               # f32 (1, H) -> broadcast over batch
        acc = jnp.dot(h, w, preferred_element_type=jnp.float32)
        h = jnp.maximum(acc + shift, 0.0).astype(jnp.bfloat16)

    w_out = p[2 * num_hidden][...]              # bf16 (H_last, 128)
    b_out = p[2 * num_hidden + 1][...]          # f32  (1, 128)
    o_ref[...] = jnp.dot(h, w_out, preferred_element_type=jnp.float32) + b_out


def mlp_forward(x, hidden_params, out_w, out_b, *, tile_b=None):
    """x: (B, D_in) f32; hidden_params: list of (w_folded f32, shift f32 (1,H));
    out_w: (H_last, n_out) f32; out_b: (1, n_out) f32.  Returns (B, n_out) f32."""
    B, D_in = x.shape
    num_hidden = len(hidden_params)
    n_out = out_w.shape[1]

    # --- batch tile selection ----------------------------------------------
    if tile_b is None:
        tile_b = _pick_tile_b(B)
    tile_b = _round_up(tile_b, SUBLANE)

    grid_b = pl.cdiv(B, tile_b)
    B_pad = grid_b * tile_b
    if B_pad != B:
        # Only for awkward batch sizes (_pick_tile_b avoids this in the common
        # case, so there is usually no extra HBM pass over x here).
        x = jnp.pad(x, ((0, B_pad - B), (0, 0)))

    # --- lane-dense output head: pad n_out -> 128 columns --------------------
    n_out_pad = _round_up(n_out, LANE)
    out_w_p = jnp.pad(out_w, ((0, 0), (0, n_out_pad - n_out)))
    out_b_p = jnp.pad(out_b, ((0, 0), (0, n_out_pad - n_out)))

    # --- bf16 weights (f32 fold done on the host), f32 shifts/bias -----------
    flat_params = []
    for (w, shift) in hidden_params:
        flat_params += [w.astype(jnp.bfloat16), shift.astype(jnp.float32)]
    flat_params += [out_w_p.astype(jnp.bfloat16), out_b_p.astype(jnp.float32)]

    # x / out are tiled over the batch; parameters are grid-invariant, so keep
    # them as whole-array VMEM residents (single buffer, no per-step DMA).
    in_specs = [pl.BlockSpec((tile_b, D_in), lambda i: (i, 0))]
    in_specs += [pl.BlockSpec(memory_space=pltpu.MemorySpace.VMEM)
                 for _ in flat_params]
    out_spec = pl.BlockSpec((tile_b, n_out_pad), lambda i: (i, 0))

    kernel = functools.partial(_mlp_kernel, num_hidden)

    out_padded = pl.pallas_call(
        kernel,
        out_shape=jax.ShapeDtypeStruct((B_pad, n_out_pad), jnp.float32),
        grid_spec=pltpu.PrefetchScalarGridSpec(
            num_scalar_prefetch=0,
            grid=(grid_b,),
            in_specs=in_specs,
            out_specs=out_spec,
        ),
        compiler_params=pltpu.CompilerParams(
            dimension_semantics=("parallel",),      # batch tiles shard across TCs (v7x)
            vmem_limit_bytes=VMEM_LIMIT_BYTES,      # big-tile budget, portable to v7x 64 MiB
        ),
    )(x, *flat_params)

    return out_padded[:B, :n_out]


def init_params(key, input_dim, hidden_dims, eps=1e-5):
    """Deterministic synthetic parameters (shapes match the PyTorch module).

    BatchNorm (running stats) + Linear bias are folded on the host in f32:
        scale    = gamma / sqrt(var + eps)
        w_folded = w * scale
        shift    = (b - mean) * scale + beta
    so the layer is exactly relu(x @ w_folded + shift).
    """
    hidden_params = []
    prev = input_dim
    for h in hidden_dims:
        key, kw, kb, kg, kbeta = jax.random.split(key, 5)
        w = jax.random.normal(kw, (prev, h), jnp.float32) / jnp.sqrt(prev)
        b = jax.random.normal(kb, (h,), jnp.float32) * 0.01
        gamma = 1.0 + 0.1 * jax.random.normal(kg, (h,), jnp.float32)
        beta = 0.1 * jax.random.normal(kbeta, (h,), jnp.float32)
        running_mean = jnp.zeros((h,), jnp.float32)
        running_var = jnp.ones((h,), jnp.float32)
        scale = gamma / jnp.sqrt(running_var + eps)
        w_folded = w * scale                      # fold BN scale into the matmul
        shift = (b - running_mean) * scale + beta
        hidden_params.append((w_folded, shift.reshape(1, h)))
        prev = h

    key, kw, kb = jax.random.split(key, 3)
    out_w = jax.random.normal(kw, (prev, 2), jnp.float32) / jnp.sqrt(prev)
    out_b = (jax.random.normal(kb, (2,), jnp.float32) * 0.01).reshape(1, 2)
    return hidden_params, out_w, out_b


def reference_forward_mixed(x, hidden_params, out_w, out_b):
    """Mirror of the kernel's precision policy: bf16 dot operands, f32 accumulate,
    f32 epilogue. Used for the tight numerical check."""
    h = x.astype(jnp.bfloat16)
    for (w, shift) in hidden_params:
        acc = jnp.dot(h, w.astype(jnp.bfloat16), preferred_element_type=jnp.float32)
        h = jnp.maximum(acc + shift, 0.0).astype(jnp.bfloat16)
    return jnp.dot(h, out_w.astype(jnp.bfloat16),
                   preferred_element_type=jnp.float32) + out_b


def reference_forward_f32(x, hidden_params, out_w, out_b):
    """Pure-f32 reference (matches the PyTorch eval-mode forward with folded BN)."""
    h = x
    for (w, shift) in hidden_params:
        h = jnp.maximum(jnp.dot(h, w) + shift, 0.0)
    return jnp.dot(h, out_w) + out_b


if __name__ == "__main__":
    # Small, TPU-friendly shapes consistent with the module's forward:
    # x: (batch, input_dim) -> logits: (batch, 2)
    batch = 16
    input_dim = 256
    hidden_dims = [256, 256, 128, 128]

    key = jax.random.PRNGKey(0)
    key, kx = jax.random.split(key)
    x = jax.random.normal(kx, (batch, input_dim), jnp.float32)

    hidden_params, out_w, out_b = init_params(key, input_dim, hidden_dims)

    out = mlp_forward(x, hidden_params, out_w, out_b)
    out = jax.block_until_ready(out)
    assert out.shape == (batch, 2)

    # Tight check vs a reference with the identical precision policy
    # (bf16 operands, f32 accumulation, f32 epilogue).
    ref_mixed = reference_forward_mixed(x, hidden_params, out_w, out_b)
    assert jnp.allclose(out, ref_mixed, atol=2e-4, rtol=2e-4), \
        "mismatch vs mixed-precision JAX reference"

    # Loose sanity check vs the full-f32 reference (bf16 weight rounding only).
    ref_f32 = reference_forward_f32(x, hidden_params, out_w, out_b)
    assert jnp.allclose(out, ref_f32, atol=1e-1, rtol=1e-1), \
        "mismatch vs f32 JAX reference"

    print("KERNEL_OK")
</pallas_src>

<mosaic_0001>
module attributes {stable_mosaic.version = 11 : i64} {
  func.func @_mlp_kernel(%arg0: i32, %arg1: memref<8x256xf32, #tpu.memory_space<vmem>>, %arg2: memref<256x256xbf16, #tpu.memory_space<vmem>>, %arg3: memref<1x256xf32, #tpu.memory_space<vmem>>, %arg4: memref<256x256xbf16, #tpu.memory_space<vmem>>, %arg5: memref<1x256xf32, #tpu.memory_space<vmem>>, %arg6: memref<256x128xbf16, #tpu.memory_space<vmem>>, %arg7: memref<1x128xf32, #tpu.memory_space<vmem>>, %arg8: memref<128x128xbf16, #tpu.memory_space<vmem>>, %arg9: memref<1x128xf32, #tpu.memory_space<vmem>>, %arg10: memref<128x128xbf16, #tpu.memory_space<vmem>>, %arg11: memref<1x128xf32, #tpu.memory_space<vmem>>, %arg12: memref<8x128xf32, #tpu.memory_space<vmem>>) attributes {dimension_semantics = [#tpu.dimension_semantics<parallel>], iteration_bounds = array<i64: 2>, scalar_prefetch = 0 : i64, scratch_operands = 0 : i64, tpu.core_type = #tpu.core_type<tc>, window_params = [{transform_indices = @transform_0, window_bounds = array<i64: 8, 256>}, {pipeline_mode = #tpu.pipeline_mode<synchronous>, transform_indices = @transform_1, window_bounds = array<i64: 256, 256>}, {pipeline_mode = #tpu.pipeline_mode<synchronous>, transform_indices = @transform_2, window_bounds = array<i64: 1, 256>}, {pipeline_mode = #tpu.pipeline_mode<synchronous>, transform_indices = @transform_3, window_bounds = array<i64: 256, 256>}, {pipeline_mode = #tpu.pipeline_mode<synchronous>, transform_indices = @transform_4, window_bounds = array<i64: 1, 256>}, {pipeline_mode = #tpu.pipeline_mode<synchronous>, transform_indices = @transform_5, window_bounds = array<i64: 256, 128>}, {pipeline_mode = #tpu.pipeline_mode<synchronous>, transform_indices = @transform_6, window_bounds = array<i64: 1, 128>}, {pipeline_mode = #tpu.pipeline_mode<synchronous>, transform_indices = @transform_7, window_bounds = array<i64: 128, 128>}, {pipeline_mode = #tpu.pipeline_mode<synchronous>, transform_indices = @transform_8, window_bounds = array<i64: 1, 128>}, {pipeline_mode = #tpu.pipeline_mode<synchronous>, transform_indices = @transform_9, window_bounds = array<i64: 128, 128>}, {pipeline_mode = #tpu.pipeline_mode<synchronous>, transform_indices = @transform_10, window_bounds = array<i64: 1, 128>}, {transform_indices = @transform_11, window_bounds = array<i64: 8, 128>}]} {
    %c0 = arith.constant 0 : index
    %c0_0 = arith.constant 0 : index
    %0 = vector.load %arg1[%c0, %c0_0] : memref<8x256xf32, #tpu.memory_space<vmem>>, vector<8x256xf32>
    %1 = arith.truncf %0 : vector<8x256xf32> to vector<8x256xbf16>
    %c0_1 = arith.constant 0 : index
    %c0_2 = arith.constant 0 : index
    %2 = vector.load %arg2[%c0_1, %c0_2] : memref<256x256xbf16, #tpu.memory_space<vmem>>, vector<256x256xbf16>
    %c0_3 = arith.constant 0 : index
    %c0_4 = arith.constant 0 : index
    %3 = vector.load %arg3[%c0_3, %c0_4] : memref<1x256xf32, #tpu.memory_space<vmem>>, vector<1x256xf32>
    %cst = arith.constant dense<0.000000e+00> : vector<8x256xf32>
    %4 = tpu.matmul %1, %2, %cst {dimension_numbers = #tpu.dot_dimension_numbers<[1], [0], [0], [1], [0, 0, 1, 1], [], []>} : vector<8x256xbf16>, vector<256x256xbf16>, vector<8x256xf32> -> vector<8x256xf32>
    %5 = vector.broadcast %3 : vector<1x256xf32> to vector<8x256xf32>
    %6 = arith.addf %4, %5 : vector<8x256xf32>
    %cst_5 = arith.constant 0.000000e+00 : f32
    %7 = vector.broadcast %cst_5 : f32 to vector<8x256xf32>
    %8 = arith.maximumf %6, %7 : vector<8x256xf32>
    %9 = arith.truncf %8 : vector<8x256xf32> to vector<8x256xbf16>
    %c0_6 = arith.constant 0 : index
    %c0_7 = arith.constant 0 : index
    %10 = vector.load %arg4[%c0_6, %c0_7] : memref<256x256xbf16, #tpu.memory_space<vmem>>, vector<256x256xbf16>
    %c0_8 = arith.constant 0 : index
    %c0_9 = arith.constant 0 : index
    %11 = vector.load %arg5[%c0_8, %c0_9] : memref<1x256xf32, #tpu.memory_space<vmem>>, vector<1x256xf32>
    %cst_10 = arith.constant dense<0.000000e+00> : vector<8x256xf32>
    %12 = tpu.matmul %9, %10, %cst_10 {dimension_numbers = #tpu.dot_dimension_numbers<[1], [0], [0], [1], [0, 0, 1, 1], [], []>} : vector<8x256xbf16>, vector<256x256xbf16>, vector<8x256xf32> -> vector<8x256xf32>
    %13 = vector.broadcast %11 : vector<1x256xf32> to vector<8x256xf32>
    %14 = arith.addf %12, %13 : vector<8x256xf32>
    %cst_11 = arith.constant 0.000000e+00 : f32
    %15 = vector.broadcast %cst_11 : f32 to vector<8x256xf32>
    %16 = arith.maximumf %14, %15 : vector<8x256xf32>
    %17 = arith.truncf %16 : vector<8x256xf32> to vector<8x256xbf16>
    %c0_12 = arith.constant 0 : index
    %c0_13 = arith.constant 0 : index
    %18 = vector.load %arg6[%c0_12, %c0_13] : memref<256x128xbf16, #tpu.memory_space<vmem>>, vector<256x128xbf16>
    %c0_14 = arith.constant 0 : index
    %c0_15 = arith.constant 0 : index
    %19 = vector.load %arg7[%c0_14, %c0_15] : memref<1x128xf32, #tpu.memory_space<vmem>>, vector<1x128xf32>
    %cst_16 = arith.constant dense<0.000000e+00> : vector<8x128xf32>
    %20 = tpu.matmul %17, %18, %cst_16 {dimension_numbers = #tpu.dot_dimension_numbers<[1], [0], [0], [1], [0, 0, 1, 1], [], []>} : vector<8x256xbf16>, vector<256x128xbf16>, vector<8x128xf32> -> vector<8x128xf32>
    %21 = vector.broadcast %19 : vector<1x128xf32> to vector<8x128xf32>
    %22 = arith.addf %20, %21 : vector<8x128xf32>
    %cst_17 = arith.constant 0.000000e+00 : f32
    %23 = vector.broadcast %cst_17 : f32 to vector<8x128xf32>
    %24 = arith.maximumf %22, %23 : vector<8x128xf32>
    %25 = arith.truncf %24 : vector<8x128xf32> to vector<8x128xbf16>
    %c0_18 = arith.constant 0 : index
    %c0_19 = arith.constant 0 : index
    %26 = vector.load %arg8[%c0_18, %c0_19] : memref<128x128xbf16, #tpu.memory_space<vmem>>, vector<128x128xbf16>
    %c0_20 = arith.constant 0 : index
    %c0_21 = arith.constant 0 : index
    %27 = vector.load %arg9[%c0_20, %c0_21] : memref<1x128xf32, #tpu.memory_space<vmem>>, vector<1x128xf32>
    %cst_22 = arith.constant dense<0.000000e+00> : vector<8x128xf32>
    %28 = tpu.matmul %25, %26, %cst_22 {dimension_numbers = #tpu.dot_dimension_numbers<[1], [0], [0], [1], [0, 0, 1, 1], [], []>} : vector<8x128xbf16>, vector<128x128xbf16>, vector<8x128xf32> -> vector<8x128xf32>
    %29 = vector.broadcast %27 : vector<1x128xf32> to vector<8x128xf32>
    %30 = arith.addf %28, %29 : vector<8x128xf32>
    %cst_23 = arith.constant 0.000000e+00 : f32
    %31 = vector.broadcast %cst_23 : f32 to vector<8x128xf32>
    %32 = arith.maximumf %30, %31 : vector<8x128xf32>
    %33 = arith.truncf %32 : vector<8x128xf32> to vector<8x128xbf16>
    %c0_24 = arith.constant 0 : index
    %c0_25 = arith.constant 0 : index
    %34 = vector.load %arg10[%c0_24, %c0_25] : memref<128x128xbf16, #tpu.memory_space<vmem>>, vector<128x128xbf16>
    %c0_26 = arith.constant 0 : index
    %c0_27 = arith.constant 0 : index
    %35 = vector.load %arg11[%c0_26, %c0_27] : memref<1x128xf32, #tpu.memory_space<vmem>>, vector<1x128xf32>
    %cst_28 = arith.constant dense<0.000000e+00> : vector<8x128xf32>
    %36 = tpu.matmul %33, %34, %cst_28 {dimension_numbers = #tpu.dot_dimension_numbers<[1], [0], [0], [1], [0, 0, 1, 1], [], []>} : vector<8x128xbf16>, vector<128x128xbf16>, vector<8x128xf32> -> vector<8x128xf32>
    %37 = vector.broadcast %35 : vector<1x128xf32> to vector<8x128xf32>
    %38 = arith.addf %36, %37 : vector<8x128xf32>
    %c0_29 = arith.constant 0 : index
    %c0_30 = arith.constant 0 : index
    %39 = vector.load %arg12[%c0_29, %c0_30] : memref<8x128xf32, #tpu.memory_space<vmem>>, vector<8x128xf32>
    tpu.vector_store %arg12[%c0_29, %c0_30], %38 {strides = array<i32>} : memref<8x128xf32, #tpu.memory_space<vmem>>, vector<8x128xf32>,
    return
  }
  func.func @transform_0(%arg0: i32) -> (i32, i32) {
    %c0_i32 = arith.constant 0 : i32
    %c0_i32_0 = arith.constant 0 : i32
    return %arg0, %c0_i32 : i32, i32
  }
  func.func @transform_1(%arg0: i32) -> (i32, i32) {
    %c0_i32 = arith.constant 0 : i32
    %c0_i32_0 = arith.constant 0 : i32
    %c0_i32_1 = arith.constant 0 : i32
    return %c0_i32, %c0_i32_0 : i32, i32
  }
  func.func @transform_2(%arg0: i32) -> (i32, i32) {
    %c0_i32 = arith.constant 0 : i32
    %c0_i32_0 = arith.constant 0 : i32
    %c0_i32_1 = arith.constant 0 : i32
    return %c0_i32, %c0_i32_0 : i32, i32
  }
  func.func @transform_3(%arg0: i32) -> (i32, i32) {
    %c0_i32 = arith.constant 0 : i32
    %c0_i32_0 = arith.constant 0 : i32
    %c0_i32_1 = arith.constant 0 : i32
    return %c0_i32, %c0_i32_0 : i32, i32
  }
  func.func @transform_4(%arg0: i32) -> (i32, i32) {
    %c0_i32 = arith.constant 0 : i32
    %c0_i32_0 = arith.constant 0 : i32
    %c0_i32_1 = arith.constant 0 : i32
    return %c0_i32, %c0_i32_0 : i32, i32
  }
  func.func @transform_5(%arg0: i32) -> (i32, i32) {
    %c0_i32 = arith.constant 0 : i32
    %c0_i32_0 = arith.constant 0 : i32
    %c0_i32_1 = arith.constant 0 : i32
    return %c0_i32, %c0_i32_0 : i32, i32
  }
  func.func @transform_6(%arg0: i32) -> (i32, i32) {
    %c0_i32 = arith.constant 0 : i32
    %c0_i32_0 = arith.constant 0 : i32
    %c0_i32_1 = arith.constant 0 : i32
    return %c0_i32, %c0_i32_0 : i32, i32
  }
  func.func @transform_7(%arg0: i32) -> (i32, i32) {
    %c0_i32 = arith.constant 0 : i32
    %c0_i32_0 = arith.constant 0 : i32
    %c0_i32_1 = arith.constant 0 : i32
    return %c0_i32, %c0_i32_0 : i32, i32
  }
  func.func @transform_8(%arg0: i32) -> (i32, i32) {
    %c0_i32 = arith.constant 0 : i32
    %c0_i32_0 = arith.constant 0 : i32
    %c0_i32_1 = arith.constant 0 : i32
    return %c0_i32, %c0_i32_0 : i32, i32
  }
  func.func @transform_9(%arg0: i32) -> (i32, i32) {
    %c0_i32 = arith.constant 0 : i32
    %c0_i32_0 = arith.constant 0 : i32
    %c0_i32_1 = arith.constant 0 : i32
    return %c0_i32, %c0_i32_0 : i32, i32
  }
  func.func @transform_10(%arg0: i32) -> (i32, i32) {
    %c0_i32 = arith.constant 0 : i32
    %c0_i32_0 = arith.constant 0 : i32
    %c0_i32_1 = arith.constant 0 : i32
    return %c0_i32, %c0_i32_0 : i32, i32
  }
  func.func @transform_11(%arg0: i32) -> (i32, i32) {
    %c0_i32 = arith.constant 0 : i32
    %c0_i32_0 = arith.constant 0 : i32
    return %arg0, %c0_i32 : i32, i32
  }
}

</mosaic_0001>

<llo_original>
// kernel: tpu_custom_call.1
$region0: #{tpu_custom_call.1}
  #allocation0 [shape = 'u32[]', space=smem, size = 0x4, offset = 0x4, fixed_abs, tag = 'smem constant byte address 0x4 - core index']
  #allocation1 [shape = 'u32[144,128]{1,0:T(1,128)}', space=vmem, size = 0x12000, scoped, tag = 'internal scratch']
  %s0 = inlined_call_operand.hbm [shape: f32[16,256], index: 0, kind: input, shape index: {}]
  %s1 = inlined_call_operand.hbm [shape: bf16[256,256], index: 1, kind: input, shape index: {}]
  %s2 = inlined_call_operand.vmem [shape: f32[1,256], index: 2, kind: input, shape index: {}]
  %s3 = inlined_call_operand.hbm [shape: bf16[256,256], index: 3, kind: input, shape index: {}]
  %s4 = inlined_call_operand.vmem [shape: f32[1,256], index: 4, kind: input, shape index: {}]
  %s5 = inlined_call_operand.hbm [shape: bf16[256,128], index: 5, kind: input, shape index: {}]
  %s6 = inlined_call_operand.vmem [shape: f32[1,128], index: 6, kind: input, shape index: {}]
  %s7 = inlined_call_operand.hbm [shape: bf16[128,128], index: 7, kind: input, shape index: {}]
  %s8 = inlined_call_operand.vmem [shape: f32[1,128], index: 8, kind: input, shape index: {}]
  %s9 = inlined_call_operand.hbm [shape: bf16[128,128], index: 9, kind: input, shape index: {}]
  %s10 = inlined_call_operand.vmem [shape: f32[1,128], index: 10, kind: input, shape index: {}]
  %s11 = inlined_call_operand.hbm [shape: f32[16,128], index: 11, kind: output, shape index: {}]
  %s12 = sld [smem:[#allocation0]]
  $region101: #{tpu_custom_call.1} parent=0
    _
  %s14 = ssub.s32 1, %s12
  %s15 = scalar_select 0, %s14, %s12
  $region1: #{tpu_custom_call.1} parent=0
    #allocation2 [shape = 'u8[16384]{0}', space=vmem, size = 0x4000, scoped, tag = 'input window, operand 0']
    #allocation3 [shape = 's32[2]{0}', space=sflag, size = 0x8, scoped, tag = 'scoped memory for tpu_custom_call.1']
    #allocation4 [shape = 's32[2]{0}', space=sflag, size = 0x8, scoped, tag = 'scoped memory for tpu_custom_call.1']
    #allocation5 [shape = 'u8[131072]{0}', space=vmem, size = 0x20000, scoped, tag = 'input window, operand 1, single buffered']
    #allocation6 [shape = 's32[1]{0}', space=sflag, size = 0x4, scoped, tag = 'scoped memory for tpu_custom_call.1']
    #allocation7 [shape = 'u8[131072]{0}', space=vmem, size = 0x20000, scoped, tag = 'input window, operand 3, single buffered']
    #allocation8 [shape = 'u8[65536]{0}', space=vmem, size = 0x10000, scoped, tag = 'input window, operand 5, single buffered']
    #allocation9 [shape = 's32[1]{0}', space=sflag, size = 0x4, scoped, tag = 'scoped memory for tpu_custom_call.1']
    #allocation10 [shape = 'u8[32768]{0}', space=vmem, size = 0x8000, scoped, tag = 'input window, operand 7, single buffered']
    #allocation11 [shape = 'u8[32768]{0}', space=vmem, size = 0x8000, scoped, tag = 'input window, operand 9, single buffered']
    #allocation12 [shape = 's32[1]{0}', space=sflag, size = 0x4, scoped, tag = 'scoped memory for tpu_custom_call.1']
    #allocation13 [shape = 'u8[8192]{0}', space=vmem, size = 0x2000, scoped, tag = 'output window, operand 0']
    %16 = vsyncpa [#allocation3], 0
    %s17 = scalar_lea.sflag [#allocation3], 1
    %18 = vsyncpa %s17, 0
    %19 = vsyncpa [#allocation6], 0
    %20 = vsyncpa [#allocation9], 0
    %21 = vsyncpa [#allocation12], 0
    %22 = vsyncpa [#allocation4], 0
    %s23 = scalar_lea.sflag [#allocation4], 1
    %24 = vsyncpa %s23, 0
    loop: start=0, step=1, limit=4
    $region2: #{tpu_custom_call.1} parent=1 // loop_pre_header
      _
    $region3: #{tpu_custom_call.1} parent=1 // loop_header
      %s26 = sphi 0, %s30
      %p27 = scmp.ge.s32.totalorder %s26, 4
      %s36 = sphi 0, %s38
      %s39 = sphi 0, %s36
      %s40 = sphi 0, %s39
      %s56 = sphi 0, %s40
      %s60 = sphi 0, %s60
      %s62 = sphi 0, %s60
      %s63 = sphi 0, %s62
      %s77 = sphi 0, %s63
      %s81 = sphi 0, %s81
      %s83 = sphi 0, %s81
      %s84 = sphi 0, %s83
      %s98 = sphi 0, %s84
      %s102 = sphi 0, %s102
      %s104 = sphi 0, %s102
      %s105 = sphi 0, %s104
      %s119 = sphi 0, %s105
      %s123 = sphi 0, %s123
      %s125 = sphi 0, %s123
      %s126 = sphi 0, %s125
      %s140 = sphi 0, %s126
      %s144 = sphi 0, %s144
      %s146 = sphi 0, %s144
      %s147 = sphi 0, %s146
      %s161 = sphi 0, %s147
      %s165 = sphi 0, %s165
      %s167 = sphi 0, %s165
      %s168 = sphi 0, %s167
      %s182 = sphi 0, %s168
      %s186 = sphi 0, %s186
      %s188 = sphi 0, %s186
      %s189 = sphi 0, %s188
      %s203 = sphi 0, %s189
      %s207 = sphi 0, %s207
      %s209 = sphi 0, %s207
      %s210 = sphi 0, %s209
      %s224 = sphi 0, %s210
      %s228 = sphi 0, %s228
      %s230 = sphi 0, %s228
      %s231 = sphi 0, %s230
      %s245 = sphi 0, %s231
      %s249 = sphi 0, %s249
      %s251 = sphi 0, %s249
      %s252 = sphi 0, %s251
      %s266 = sphi 0, %s252
      %s272 = sphi 0, %s274
      %s275 = sphi 0, %s272
      %s276 = sphi 0, %s275
      %s292 = sphi 0, %s276
    $region4: #{tpu_custom_call.1} parent=1 // loop_header_branch
      %29 = sbr.rel (%p27) target = $region8
    $region5: #{tpu_custom_call.1} parent=1 // loop_body
      %s31 = ssub.s32 %s26, 1
      %s32 = ssub.s32 %s26, 2
      %s33 = sadd.s32 %s26, 1
      %s34 = ssub.s32 %s26, %s33
      %p35 = scmp.eq.s32.totalorder %s34, 0
      %s37 = sadd.s32 %s36, 1
      %s38 = scalar_select %p35, %s36, %s37
      %p41 = pneg %p35
      %p42 = scmp.eq.s32.totalorder %s26, 1
      %p43 = por %p41, %p42
      %p44 = scmp.ne.s32.totalorder %s36, %s39
      %p45 = scmp.eq.s32.totalorder %s26, 0
      %p46 = por %p44, %p45
      %p47 = scmp.ne.s32.totalorder %s36, %s39
      %p48 = scmp.eq.s32.totalorder %s31, 1
      %p49 = por %p47, %p48
      %p50 = scmp.ne.s32.totalorder %s39, %s40
      %p51 = scmp.eq.s32.totalorder %s31, 0
      %p52 = por %p50, %p51
      %p53 = scmp.ne.s32.totalorder %s39, %s40
      %p54 = scmp.eq.s32.totalorder %s32, 1
      %p55 = por %p53, %p54
      %p57 = scmp.ne.s32.totalorder %s40, %s56
      %p58 = scmp.eq.s32.totalorder %s32, 0
      %p59 = por %p57, %p58
      %s61 = sadd.s32 %s60, 1
      %p64 = scmp.eq.s32.totalorder %s26, 1
      %p65 = scmp.ne.s32.totalorder %s60, %s62
      %p66 = scmp.eq.s32.totalorder %s26, 0
      %p67 = por %p65, %p66
      %p68 = scmp.ne.s32.totalorder %s60, %s62
      %p69 = scmp.eq.s32.totalorder %s31, 1
      %p70 = por %p68, %p69
      %p71 = scmp.ne.s32.totalorder %s62, %s63
      %p72 = scmp.eq.s32.totalorder %s31, 0
      %p73 = por %p71, %p72
      %p74 = scmp.ne.s32.totalorder %s62, %s63
      %p75 = scmp.eq.s32.totalorder %s32, 1
      %p76 = por %p74, %p75
      %p78 = scmp.ne.s32.totalorder %s63, %s77
      %p79 = scmp.eq.s32.totalorder %s32, 0
      %p80 = por %p78, %p79
      %s82 = sadd.s32 %s81, 1
      %p85 = scmp.eq.s32.totalorder %s26, 1
      %p86 = scmp.ne.s32.totalorder %s81, %s83
      %p87 = scmp.eq.s32.totalorder %s26, 0
      %p88 = por %p86, %p87
      %p89 = scmp.ne.s32.totalorder %s81, %s83
      %p90 = scmp.eq.s32.totalorder %s31, 1
      %p91 = por %p89, %p90
      %p92 = scmp.ne.s32.totalorder %s83, %s84
      %p93 = scmp.eq.s32.totalorder %s31, 0
      %p94 = por %p92, %p93
      %p95 = scmp.ne.s32.totalorder %s83, %s84
      %p96 = scmp.eq.s32.totalorder %s32, 1
      %p97 = por %p95, %p96
      %p99 = scmp.ne.s32.totalorder %s84, %s98
      %p100 = scmp.eq.s32.totalorder %s32, 0
      %p101 = por %p99, %p100
      %s103 = sadd.s32 %s102, 1
      %p106 = scmp.eq.s32.totalorder %s26, 1
      %p107 = scmp.ne.s32.totalorder %s102, %s104
      %p108 = scmp.eq.s32.totalorder %s26, 0
      %p109 = por %p107, %p108
      %p110 = scmp.ne.s32.totalorder %s102, %s104
      %p111 = scmp.eq.s32.totalorder %s31, 1
      %p112 = por %p110, %p111
      %p113 = scmp.ne.s32.totalorder %s104, %s105
      %p114 = scmp.eq.s32.totalorder %s31, 0
      %p115 = por %p113, %p114
      %p116 = scmp.ne.s32.totalorder %s104, %s105
      %p117 = scmp.eq.s32.totalorder %s32, 1
      %p118 = por %p116, %p117
      %p120 = scmp.ne.s32.totalorder %s105, %s119
      %p121 = scmp.eq.s32.totalorder %s32, 0
      %p122 = por %p120, %p121
      %s124 = sadd.s32 %s123, 1
      %p127 = scmp.eq.s32.totalorder %s26, 1
      %p128 = scmp.ne.s32.totalorder %s123, %s125
      %p129 = scmp.eq.s32.totalorder %s26, 0
      %p130 = por %p128, %p129
      %p131 = scmp.ne.s32.totalorder %s123, %s125
      %p132 = scmp.eq.s32.totalorder %s31, 1
      %p133 = por %p131, %p132
      %p134 = scmp.ne.s32.totalorder %s125, %s126
      %p135 = scmp.eq.s32.totalorder %s31, 0
      %p136 = por %p134, %p135
      %p137 = scmp.ne.s32.totalorder %s125, %s126
      %p138 = scmp.eq.s32.totalorder %s32, 1
      %p139 = por %p137, %p138
      %p141 = scmp.ne.s32.totalorder %s126, %s140
      %p142 = scmp.eq.s32.totalorder %s32, 0
      %p143 = por %p141, %p142
      %s145 = sadd.s32 %s144, 1
      %p148 = scmp.eq.s32.totalorder %s26, 1
      %p149 = scmp.ne.s32.totalorder %s144, %s146
      %p150 = scmp.eq.s32.totalorder %s26, 0
      %p151 = por %p149, %p150
      %p152 = scmp.ne.s32.totalorder %s144, %s146
      %p153 = scmp.eq.s32.totalorder %s31, 1
      %p154 = por %p152, %p153
      %p155 = scmp.ne.s32.totalorder %s146, %s147
      %p156 = scmp.eq.s32.totalorder %s31, 0
      %p157 = por %p155, %p156
      %p158 = scmp.ne.s32.totalorder %s146, %s147
      %p159 = scmp.eq.s32.totalorder %s32, 1
      %p160 = por %p158, %p159
      %p162 = scmp.ne.s32.totalorder %s147, %s161
      %p163 = scmp.eq.s32.totalorder %s32, 0
      %p164 = por %p162, %p163
      %s166 = sadd.s32 %s165, 1
      %p169 = scmp.eq.s32.totalorder %s26, 1
      %p170 = scmp.ne.s32.totalorder %s165, %s167
      %p171 = scmp.eq.s32.totalorder %s26, 0
      %p172 = por %p170, %p171
      %p173 = scmp.ne.s32.totalorder %s165, %s167
      %p174 = scmp.eq.s32.totalorder %s31, 1
      %p175 = por %p173, %p174
      %p176 = scmp.ne.s32.totalorder %s167, %s168
      %p177 = scmp.eq.s32.totalorder %s31, 0
      %p178 = por %p176, %p177
      %p179 = scmp.ne.s32.totalorder %s167, %s168
      %p180 = scmp.eq.s32.totalorder %s32, 1
      %p181 = por %p179, %p180
      %p183 = scmp.ne.s32.totalorder %s168, %s182
      %p184 = scmp.eq.s32.totalorder %s32, 0
      %p185 = por %p183, %p184
      %s187 = sadd.s32 %s186, 1
      %p190 = scmp.eq.s32.totalorder %s26, 1
      %p191 = scmp.ne.s32.totalorder %s186, %s188
      %p192 = scmp.eq.s32.totalorder %s26, 0
      %p193 = por %p191, %p192
      %p194 = scmp.ne.s32.totalorder %s186, %s188
      %p195 = scmp.eq.s32.totalorder %s31, 1
      %p196 = por %p194, %p195
      %p197 = scmp.ne.s32.totalorder %s188, %s189
      %p198 = scmp.eq.s32.totalorder %s31, 0
      %p199 = por %p197, %p198
      %p200 = scmp.ne.s32.totalorder %s188, %s189
      %p201 = scmp.eq.s32.totalorder %s32, 1
      %p202 = por %p200, %p201
      %p204 = scmp.ne.s32.totalorder %s189, %s203
      %p205 = scmp.eq.s32.totalorder %s32, 0
      %p206 = por %p204, %p205
      %s208 = sadd.s32 %s207, 1
      %p211 = scmp.eq.s32.totalorder %s26, 1
      %p212 = scmp.ne.s32.totalorder %s207, %s209
      %p213 = scmp.eq.s32.totalorder %s26, 0
      %p214 = por %p212, %p213
      %p215 = scmp.ne.s32.totalorder %s207, %s209
      %p216 = scmp.eq.s32.totalorder %s31, 1
      %p217 = por %p215, %p216
      %p218 = scmp.ne.s32.totalorder %s209, %s210
      %p219 = scmp.eq.s32.totalorder %s31, 0
      %p220 = por %p218, %p219
      %p221 = scmp.ne.s32.totalorder %s209, %s210
      %p222 = scmp.eq.s32.totalorder %s32, 1
      %p223 = por %p221, %p222
      %p225 = scmp.ne.s32.totalorder %s210, %s224
      %p226 = scmp.eq.s32.totalorder %s32, 0
      %p227 = por %p225, %p226
      %s229 = sadd.s32 %s228, 1
      %p232 = scmp.eq.s32.totalorder %s26, 1
      %p233 = scmp.ne.s32.totalorder %s228, %s230
      %p234 = scmp.eq.s32.totalorder %s26, 0
      %p235 = por %p233, %p234
      %p236 = scmp.ne.s32.totalorder %s228, %s230
      %p237 = scmp.eq.s32.totalorder %s31, 1
      %p238 = por %p236, %p237
      %p239 = scmp.ne.s32.totalorder %s230, %s231
      %p240 = scmp.eq.s32.totalorder %s31, 0
      %p241 = por %p239, %p240
      %p242 = scmp.ne.s32.totalorder %s230, %s231
      %p243 = scmp.eq.s32.totalorder %s32, 1
      %p244 = por %p242, %p243
      %p246 = scmp.ne.s32.totalorder %s231, %s245
      %p247 = scmp.eq.s32.totalorder %s32, 0
      %p248 = por %p246, %p247
      %s250 = sadd.s32 %s249, 1
      %p253 = scmp.eq.s32.totalorder %s26, 1
      %p254 = scmp.ne.s32.totalorder %s249, %s251
      %p255 = scmp.eq.s32.totalorder %s26, 0
      %p256 = por %p254, %p255
      %p257 = scmp.ne.s32.totalorder %s249, %s251
      %p258 = scmp.eq.s32.totalorder %s31, 1
      %p259 = por %p257, %p258
      %p260 = scmp.ne.s32.totalorder %s251, %s252
      %p261 = scmp.eq.s32.totalorder %s31, 0
      %p262 = por %p260, %p261
      %p263 = scmp.ne.s32.totalorder %s251, %s252
      %p264 = scmp.eq.s32.totalorder %s32, 1
      %p265 = por %p263, %p264
      %p267 = scmp.ne.s32.totalorder %s252, %s266
      %p268 = scmp.eq.s32.totalorder %s32, 0
      %p269 = por %p267, %p268
      %s270 = ssub.s32 %s26, %s33
      %p271 = scmp.eq.s32.totalorder %s270, 0
      %s273 = sadd.s32 %s272, 1
      %s274 = scalar_select %p271, %s272, %s273
      %p277 = pneg %p271
      %p278 = scmp.eq.s32.totalorder %s26, 1
      %p279 = por %p277, %p278
      %p280 = scmp.ne.s32.totalorder %s272, %s275
      %p281 = scmp.eq.s32.totalorder %s26, 0
      %p282 = por %p280, %p281
      %p283 = scmp.ne.s32.totalorder %s272, %s275
      %p284 = scmp.eq.s32.totalorder %s31, 1
      %p285 = por %p283, %p284
      %p286 = scmp.ne.s32.totalorder %s275, %s276
      %p287 = scmp.eq.s32.totalorder %s31, 0
      %p288 = por %p286, %p287
      %p289 = scmp.ne.s32.totalorder %s275, %s276
      %p290 = scmp.eq.s32.totalorder %s32, 1
      %p291 = por %p289, %p290
      %p293 = scmp.ne.s32.totalorder %s276, %s292
      %p294 = scmp.eq.s32.totalorder %s32, 0
      %p295 = por %p293, %p294
      %p296 = scmp.le.s32.totalorder 1, %s26
      %p297 = scmp.lt.s32.totalorder %s26, 3
      %p298 = pnand %p296, %p297
      %p299 = pneg %p298
      // Predicated region
      $region9: #{tpu_custom_call.1} parent=5 // pred_check
        _
      $region10: #{tpu_custom_call.1} parent=5 // pred_check_branch
        %301 = sbr.rel (%p298) target = $region12
      $region11: #{tpu_custom_call.1} parent=5 // pred_region
        %s302 = ssub.s32 %s26, 1
        // Predicated region
        $region13: #{tpu_custom_call.1} parent=11 // pred_check
          %p303 = pneg %p73
        $region14: #{tpu_custom_call.1} parent=11 // pred_check_branch
          %305 = sbr.rel (%p303) target = $region16
        $region15: #{tpu_custom_call.1} parent=11 // pred_region
          %s307 = ssub.s32 4096, 4096
          %308 = vsyncadd [#allocation6], %s307
          %s309 = sshll.u32 [#allocation5], 4
          %s310 = int_to_ptr.vmem [resolvable:$true] %s309
          %315 = dma.hbm_to_vmem [thread:$0]  %s1, 4096, %s310, [#allocation6], 128, 128, 8
        $region16: #{tpu_custom_call.1} parent=11 // pred_fallthru
          _
        // Predicated region
        $region17: #{tpu_custom_call.1} parent=11 // pred_check
          %p316 = pneg %p94
        $region18: #{tpu_custom_call.1} parent=11 // pred_check_branch
          %318 = sbr.rel (%p316) target = $region20
        $region19: #{tpu_custom_call.1} parent=11 // pred_region
          _
        $region20: #{tpu_custom_call.1} parent=11 // pred_fallthru
          _
        // Predicated region
        $region21: #{tpu_custom_call.1} parent=11 // pred_check
          %p319 = pneg %p115
        $region22: #{tpu_custom_call.1} parent=11 // pred_check_branch
          %321 = sbr.rel (%p319) target = $region24
        $region23: #{tpu_custom_call.1} parent=11 // pred_region
          %s323 = ssub.s32 4096, 4096
          %324 = vsyncadd [#allocation6], %s323
          %s325 = sshll.u32 [#allocation7], 4
          %s326 = int_to_ptr.vmem [resolvable:$true] %s325
          %331 = dma.hbm_to_vmem [thread:$0]  %s3, 4096, %s326, [#allocation6], 128, 128, 8
        $region24: #{tpu_custom_call.1} parent=11 // pred_fallthru
          _
        // Predicated region
        $region25: #{tpu_custom_call.1} parent=11 // pred_check
          %p332 = pneg %p136
        $region26: #{tpu_custom_call.1} parent=11 // pred_check_branch
          %334 = sbr.rel (%p332) target = $region28
        $region27: #{tpu_custom_call.1} parent=11 // pred_region
          _
        $region28: #{tpu_custom_call.1} parent=11 // pred_fallthru
          _
        // Predicated region
        $region29: #{tpu_custom_call.1} parent=11 // pred_check
          %p335 = pneg %p157
        $region30: #{tpu_custom_call.1} parent=11 // pred_check_branch
          %337 = sbr.rel (%p335) target = $region32
        $region31: #{tpu_custom_call.1} parent=11 // pred_region
          %s339 = ssub.s32 2048, 2048
          %340 = vsyncadd [#allocation9], %s339
          %s341 = sshll.u32 [#allocation8], 4
          %s342 = int_to_ptr.vmem [resolvable:$true] %s341
          %347 = dma.hbm_to_vmem [thread:$0]  %s5, 2048, %s342, [#allocation9], 64, 64, 4
        $region32: #{tpu_custom_call.1} parent=11 // pred_fallthru
          _
        // Predicated region
        $region33: #{tpu_custom_call.1} parent=11 // pred_check
          %p348 = pneg %p178
        $region34: #{tpu_custom_call.1} parent=11 // pred_check_branch
          %350 = sbr.rel (%p348) target = $region36
        $region35: #{tpu_custom_call.1} parent=11 // pred_region
          _
        $region36: #{tpu_custom_call.1} parent=11 // pred_fallthru
          _
        // Predicated region
        $region37: #{tpu_custom_call.1} parent=11 // pred_check
          %p351 = pneg %p199
        $region38: #{tpu_custom_call.1} parent=11 // pred_check_branch
          %353 = sbr.rel (%p351) target = $region40
        $region39: #{tpu_custom_call.1} parent=11 // pred_region
          %s355 = ssub.s32 1024, 1024
          %356 = vsyncadd [#allocation9], %s355
          %s357 = sshll.u32 [#allocation10], 4
          %s358 = int_to_ptr.vmem [resolvable:$true] %s357
          %363 = dma.hbm_to_vmem [thread:$0]  %s7, 1024, %s358, [#allocation9], 64, 64, 4
        $region40: #{tpu_custom_call.1} parent=11 // pred_fallthru
          _
        // Predicated region
        $region41: #{tpu_custom_call.1} parent=11 // pred_check
          %p364 = pneg %p220
        $region42: #{tpu_custom_call.1} parent=11 // pred_check_branch
          %366 = sbr.rel (%p364) target = $region44
        $region43: #{tpu_custom_call.1} parent=11 // pred_region
          _
        $region44: #{tpu_custom_call.1} parent=11 // pred_fallthru
          _
        // Predicated region
        $region45: #{tpu_custom_call.1} parent=11 // pred_check
          %p367 = pneg %p241
        $region46: #{tpu_custom_call.1} parent=11 // pred_check_branch
          %369 = sbr.rel (%p367) target = $region48
        $region47: #{tpu_custom_call.1} parent=11 // pred_region
          %s371 = ssub.s32 1024, 1024
          %372 = vsyncadd [#allocation12], %s371
          %s373 = sshll.u32 [#allocation11], 4
          %s374 = int_to_ptr.vmem [resolvable:$true] %s373
          %379 = dma.hbm_to_vmem [thread:$0]  %s9, 1024, %s374, [#allocation12], 64, 64, 4
        $region48: #{tpu_custom_call.1} parent=11 // pred_fallthru
          _
        // Predicated region
        $region49: #{tpu_custom_call.1} parent=11 // pred_check
          %p380 = pneg %p262
        $region50: #{tpu_custom_call.1} parent=11 // pred_check_branch
          %382 = sbr.rel (%p380) target = $region52
        $region51: #{tpu_custom_call.1} parent=11 // pred_region
          _
        $region52: #{tpu_custom_call.1} parent=11 // pred_fallthru
          _
      $region12: #{tpu_custom_call.1} parent=5 // pred_fallthru
        _
      %p383 = scmp.lt.s32.totalorder %s26, 2
      // Predicated region
      $region53: #{tpu_custom_call.1} parent=5 // pred_check
        %p384 = pneg %p383
      $region54: #{tpu_custom_call.1} parent=5 // pred_check_branch
        %386 = sbr.rel (%p384) target = $region56
      $region55: #{tpu_custom_call.1} parent=5 // pred_region
        // Predicated region
        $region57: #{tpu_custom_call.1} parent=55 // pred_check
          %p387 = pneg %p46
        $region58: #{tpu_custom_call.1} parent=55 // pred_check_branch
          %389 = sbr.rel (%p387) target = $region60
        $region59: #{tpu_custom_call.1} parent=55 // pred_region
          %s390 = sand.u32 %s36, 1
          %s391 = scalar_lea.sflag [#allocation3], %s390
          %s392 = sand.u32 %s36, 1
          %s393 = smul.addr %s392, 16
          %s394 = scalar_lea.vmem [#allocation2], %s393
          %s396 = ssub.s32 256, 256
          %397 = vsyncadd %s391, %s396
          %s398 = smul.addr %s26, 2
          %s399 = smul.addr %s398, 128
          %s400 = scalar_lea.hbm %s0, %s399
          %s402 = sshll.u32 %s394, 4
          %s403 = int_to_ptr.vmem [resolvable:$true] %s402
          %405 = dma.hbm_to_vmem [thread:$0]  %s400, 256, %s403, %s391
        $region60: #{tpu_custom_call.1} parent=55 // pred_fallthru
          _
      $region56: #{tpu_custom_call.1} parent=5 // pred_fallthru
        _
      %p406 = scmp.le.s32.totalorder 1, %s26
      %p407 = scmp.lt.s32.totalorder %s26, 3
      %p408 = pnand %p406, %p407
      %p409 = pneg %p408
      // Predicated region
      $region61: #{tpu_custom_call.1} parent=5 // pred_check
        _
      $region62: #{tpu_custom_call.1} parent=5 // pred_check_branch
        %411 = sbr.rel (%p408) target = $region64
      $region63: #{tpu_custom_call.1} parent=5 // pred_region
        %s412 = ssub.s32 %s26, 1
        %s413 = sand.u32 %s39, 1
        %s414 = scalar_lea.sflag [#allocation3], %s413
        %s415 = sand.u32 %s39, 1
        %s416 = smul.addr %s415, 16
        %s417 = scalar_lea.vmem [#allocation2], %s416
        // Predicated region
        $region65: #{tpu_custom_call.1} parent=63 // pred_check
          %p418 = pneg %p52
        $region66: #{tpu_custom_call.1} parent=63 // pred_check_branch
          %420 = sbr.rel (%p418) target = $region68
        $region67: #{tpu_custom_call.1} parent=63 // pred_region
          %421 = dma.done %s414, 256
        $region68: #{tpu_custom_call.1} parent=63 // pred_fallthru
          _
        // Predicated region
        $region69: #{tpu_custom_call.1} parent=63 // pred_check
          %p422 = pneg %p73
        $region70: #{tpu_custom_call.1} parent=63 // pred_check_branch
          %424 = sbr.rel (%p422) target = $region72
        $region71: #{tpu_custom_call.1} parent=63 // pred_region
          %425 = dma.done [#allocation6], 4096
        $region72: #{tpu_custom_call.1} parent=63 // pred_fallthru
          _
        // Predicated region
        $region73: #{tpu_custom_call.1} parent=63 // pred_check
          %p426 = pneg %p115
        $region74: #{tpu_custom_call.1} parent=63 // pred_check_branch
          %428 = sbr.rel (%p426) target = $region76
        $region75: #{tpu_custom_call.1} parent=63 // pred_region
          %429 = dma.done [#allocation6], 4096
        $region76: #{tpu_custom_call.1} parent=63 // pred_fallthru
          _
        // Predicated region
        $region77: #{tpu_custom_call.1} parent=63 // pred_check
          %p430 = pneg %p157
        $region78: #{tpu_custom_call.1} parent=63 // pred_check_branch
          %432 = sbr.rel (%p430) target = $region80
        $region79: #{tpu_custom_call.1} parent=63 // pred_region
          %433 = dma.done [#allocation9], 2048
        $region80: #{tpu_custom_call.1} parent=63 // pred_fallthru
          _
        // Predicated region
        $region81: #{tpu_custom_call.1} parent=63 // pred_check
          %p434 = pneg %p199
        $region82: #{tpu_custom_call.1} parent=63 // pred_check_branch
          %436 = sbr.rel (%p434) target = $region84
        $region83: #{tpu_custom_call.1} parent=63 // pred_region
          %437 = dma.done [#allocation9], 1024
        $region84: #{tpu_custom_call.1} parent=63 // pred_fallthru
          _
        // Predicated region
        $region85: #{tpu_custom_call.1} parent=63 // pred_check
          %p438 = pneg %p241
        $region86: #{tpu_custom_call.1} parent=63 // pred_check_branch
          %440 = sbr.rel (%p438) target = $region88
        $region87: #{tpu_custom_call.1} parent=63 // pred_region
          %441 = dma.done [#allocation12], 1024
        $region88: #{tpu_custom_call.1} parent=63 // pred_fallthru
          _
        %s442 = sand.u32 %s39, 1
        %s443 = scalar_lea.sflag [#allocation3], %s442
        %s444 = sand.u32 %s39, 1
        %s445 = smul.addr %s444, 16
        %s446 = scalar_lea.vmem [#allocation2], %s445
        %p447 = pneg %p52
        %p448 = pneg %p49
        %p449 = pneg %p73
        %p450 = pneg %p70
        %p451 = pneg %p94
        %p452 = pneg %p91
        %p453 = pneg %p115
        %p454 = pneg %p112
        %p455 = pneg %p136
        %p456 = pneg %p133
        %p457 = pneg %p157
        %p458 = pneg %p154
        %p459 = pneg %p178
        %p460 = pneg %p175
        %p461 = pneg %p199
        %p462 = pneg %p196
        %p463 = pneg %p220
        %p464 = pneg %p217
        %p465 = pneg %p241
        %p466 = pneg %p238
        %p467 = pneg %p262
        %p468 = pneg %p259
        %p469 = pneg %p288
        %p470 = pneg %p285
        %s471 = sand.u32 %s275, 1
        %s472 = scalar_lea.sflag [#allocation4], %s471
        %s473 = sand.u32 %s275, 1
        %s474 = smul.addr %s473, 8
        %s475 = scalar_lea.vmem [#allocation13], %s474
        %v477 = vld [vmem:[%s417] sm:$0xff]
        %v478 = vld [vmem:[%s417 + $0x8] sm:$0xff]
        %v479 = vpack.c.bf16 %v477, %v477
        %v480 = vpack.c.bf16 %v478, %v478
        %v481 = vld [vmem:[#allocation5] sm:$0xff]
        %v482 = vld [vmem:[#allocation5 + $0x8] sm:$0xff]
        %v483 = vld [vmem:[#allocation5 + $0x10] sm:$0xff]
        %v484 = vld [vmem:[#allocation5 + $0x18] sm:$0xff]
        %v485 = vld [vmem:[#allocation5 + $0x20] sm:$0xff]
        %v486 = vld [vmem:[#allocation5 + $0x28] sm:$0xff]
        %v487 = vld [vmem:[#allocation5 + $0x30] sm:$0xff]
        %v488 = vld [vmem:[#allocation5 + $0x38] sm:$0xff]
        %v489 = vld [vmem:[#allocation5 + $0x40] sm:$0xff]
        %v490 = vld [vmem:[#allocation5 + $0x48] sm:$0xff]
        %v491 = vld [vmem:[#allocation5 + $0x50] sm:$0xff]
        %v492 = vld [vmem:[#allocation5 + $0x58] sm:$0xff]
        %v493 = vld [vmem:[#allocation5 + $0x60] sm:$0xff]
        %v494 = vld [vmem:[#allocation5 + $0x68] sm:$0xff]
        %v495 = vld [vmem:[#allocation5 + $0x70] sm:$0xff]
        %v496 = vld [vmem:[#allocation5 + $0x78] sm:$0xff]
        %v497 = vld [vmem:[#allocation5 + $0x80] sm:$0xff]
        %v498 = vld [vmem:[#allocation5 + $0x88] sm:$0xff]
        %v499 = vld [vmem:[#allocation5 + $0x90] sm:$0xff]
        %v500 = vld [vmem:[#allocation5 + $0x98] sm:$0xff]
        %v501 = vld [vmem:[#allocation5 + $0xa0] sm:$0xff]
        %v502 = vld [vmem:[#allocation5 + $0xa8] sm:$0xff]
        %v503 = vld [vmem:[#allocation5 + $0xb0] sm:$0xff]
        %v504 = vld [vmem:[#allocation5 + $0xb8] sm:$0xff]
        %v505 = vld [vmem:[#allocation5 + $0xc0] sm:$0xff]
        %v506 = vld [vmem:[#allocation5 + $0xc8] sm:$0xff]
        %v507 = vld [vmem:[#allocation5 + $0xd0] sm:$0xff]
        %v508 = vld [vmem:[#allocation5 + $0xd8] sm:$0xff]
        %v509 = vld [vmem:[#allocation5 + $0xe0] sm:$0xff]
        %v510 = vld [vmem:[#allocation5 + $0xe8] sm:$0xff]
        %v511 = vld [vmem:[#allocation5 + $0xf0] sm:$0xff]
        %v512 = vld [vmem:[#allocation5 + $0xf8] sm:$0xff]
        %v513 = vld [vmem:[%s2] sm:$0x3]
        %v515 = vlaneseq
        %v516 = vshrl.u32 %v515, 7
        %v517 = vsub.s32 0, %v516
        %v518 = vrot.slane %v513, %v517
        %v519 = vlaneseq
        %v520 = vshrl.u32 %v519, 7
        %v521 = vsub.s32 1, %v520
        %v522 = vrot.slane %v513, %v521
        %v557 = vunpack.c.l.b16 %v481
        %v558 = vunpack.c.h.b16 %v481
        %v559 = vunpack.c.l.b16 %v482
        %v560 = vunpack.c.h.b16 %v482
        %v561 = vunpack.c.l.b16 %v483
        %v562 = vunpack.c.h.b16 %v483
        %v563 = vunpack.c.l.b16 %v484
        %v564 = vunpack.c.h.b16 %v484
        %v565 = vunpack.c.l.b16 %v485
        %v566 = vunpack.c.h.b16 %v485
        %v567 = vunpack.c.l.b16 %v486
        %v568 = vunpack.c.h.b16 %v486
        %v569 = vunpack.c.l.b16 %v487
        %v570 = vunpack.c.h.b16 %v487
        %v571 = vunpack.c.l.b16 %v488
        %v572 = vunpack.c.h.b16 %v488
        %v573 = vunpack.c.l.b16 %v489
        %v574 = vunpack.c.h.b16 %v489
        %v575 = vunpack.c.l.b16 %v490
        %v576 = vunpack.c.h.b16 %v490
        %v577 = vunpack.c.l.b16 %v491
        %v578 = vunpack.c.h.b16 %v491
        %v579 = vunpack.c.l.b16 %v492
        %v580 = vunpack.c.h.b16 %v492
        %v581 = vunpack.c.l.b16 %v493
        %v582 = vunpack.c.h.b16 %v493
        %v583 = vunpack.c.l.b16 %v494
        %v584 = vunpack.c.h.b16 %v494
        %v585 = vunpack.c.l.b16 %v495
        %v586 = vunpack.c.h.b16 %v495
        %v587 = vunpack.c.l.b16 %v496
        %v588 = vunpack.c.h.b16 %v496
        %v589 = vunpack.c.l.b16 %v497
        %v590 = vunpack.c.h.b16 %v497
        %v591 = vunpack.c.l.b16 %v498
        %v592 = vunpack.c.h.b16 %v498
        %v593 = vunpack.c.l.b16 %v499
        %v594 = vunpack.c.h.b16 %v499
        %v595 = vunpack.c.l.b16 %v500
        %v596 = vunpack.c.h.b16 %v500
        %v597 = vunpack.c.l.b16 %v501
        %v598 = vunpack.c.h.b16 %v501
        %v599 = vunpack.c.l.b16 %v502
        %v600 = vunpack.c.h.b16 %v502
        %v601 = vunpack.c.l.b16 %v503
        %v602 = vunpack.c.h.b16 %v503
        %v603 = vunpack.c.l.b16 %v504
        %v604 = vunpack.c.h.b16 %v504
        %v605 = vunpack.c.l.b16 %v505
        %v606 = vunpack.c.h.b16 %v505
        %v607 = vunpack.c.l.b16 %v506
        %v608 = vunpack.c.h.b16 %v506
        %v609 = vunpack.c.l.b16 %v507
        %v610 = vunpack.c.h.b16 %v507
        %v611 = vunpack.c.l.b16 %v508
        %v612 = vunpack.c.h.b16 %v508
        %v613 = vunpack.c.l.b16 %v509
        %v614 = vunpack.c.h.b16 %v509
        %v615 = vunpack.c.l.b16 %v510
        %v616 = vunpack.c.h.b16 %v510
        %v617 = vunpack.c.l.b16 %v511
        %v618 = vunpack.c.h.b16 %v511
        %v619 = vunpack.c.l.b16 %v512
        %v620 = vunpack.c.h.b16 %v512
        %v621 = vpack.c.b16 %v559, %v557
        %v622 = vpack.c.b16 %v560, %v558
        %v623 = vpack.c.b16 %v563, %v561
        %v624 = vpack.c.b16 %v564, %v562
        %v625 = vpack.c.b16 %v567, %v565
        %v626 = vpack.c.b16 %v568, %v566
        %v627 = vpack.c.b16 %v571, %v569
        %v628 = vpack.c.b16 %v572, %v570
        %v629 = vpack.c.b16 %v575, %v573
        %v630 = vpack.c.b16 %v576, %v574
        %v631 = vpack.c.b16 %v579, %v577
        %v632 = vpack.c.b16 %v580, %v578
        %v633 = vpack.c.b16 %v583, %v581
        %v634 = vpack.c.b16 %v584, %v582
        %v635 = vpack.c.b16 %v587, %v585
        %v636 = vpack.c.b16 %v588, %v586
        %v637 = vpack.c.b16 %v591, %v589
        %v638 = vpack.c.b16 %v592, %v590
        %v639 = vpack.c.b16 %v595, %v593
        %v640 = vpack.c.b16 %v596, %v594
        %v641 = vpack.c.b16 %v599, %v597
        %v642 = vpack.c.b16 %v600, %v598
        %v643 = vpack.c.b16 %v603, %v601
        %v644 = vpack.c.b16 %v604, %v602
        %v645 = vpack.c.b16 %v607, %v605
        %v646 = vpack.c.b16 %v608, %v606
        %v647 = vpack.c.b16 %v611, %v609
        %v648 = vpack.c.b16 %v612, %v610
        %v649 = vpack.c.b16 %v615, %v613
        %v650 = vpack.c.b16 %v616, %v614
        %v651 = vpack.c.b16 %v619, %v617
        %v652 = vpack.c.b16 %v620, %v618
        %685 = vmatprep.subr.bf16.mxu0 %v622
        %686 = vmatpush1.bf16.msra.mxu0 %v621
        %687 = vmatprep.subr.bf16.mxu0 %v624
        %688 = vmatpush1.bf16.msra.mxu0 %v623
        %689 = vmatprep.subr.bf16.mxu0 %v626
        %690 = vmatpush1.bf16.msra.mxu0 %v625
        %691 = vmatprep.subr.bf16.mxu0 %v628
        %692 = vmatpush1.bf16.msra.mxu0 %v627
        %693 = vmatprep.subr.bf16.mxu0 %v630
        %694 = vmatpush1.bf16.msra.mxu0 %v629
        %695 = vmatprep.subr.bf16.mxu0 %v632
        %696 = vmatpush1.bf16.msra.mxu0 %v631
        %697 = vmatprep.subr.bf16.mxu0 %v634
        %698 = vmatpush1.bf16.msra.mxu0 %v633
        %699 = vmatprep.subr.bf16.mxu0 %v636
        %700 = vmatpush1.bf16.msra.mxu0 %v635
        %701 = vmatprep.subr.bf16.mxu0 %v638
        %702 = vmatpush1.bf16.msra.mxu0 %v637
        %703 = vmatprep.subr.bf16.mxu0 %v640
        %704 = vmatpush1.bf16.msra.mxu0 %v639
        %705 = vmatprep.subr.bf16.mxu0 %v642
        %706 = vmatpush1.bf16.msra.mxu0 %v641
        %707 = vmatprep.subr.bf16.mxu0 %v644
        %708 = vmatpush1.bf16.msra.mxu0 %v643
        %709 = vmatprep.subr.bf16.mxu0 %v646
        %710 = vmatpush1.bf16.msra.mxu0 %v645
        %711 = vmatprep.subr.bf16.mxu0 %v648
        %712 = vmatpush1.bf16.msra.mxu0 %v647
        %713 = vmatprep.subr.bf16.mxu0 %v650
        %714 = vmatpush1.bf16.msra.mxu0 %v649
        %715 = vmatprep.subr.bf16.mxu0 %v652
        %716 = vmatpush1.bf16.msra.mxu0 %v651
        %717 = vmatprep.mubr.bf16.mxu0 %v480
        %718 = vmatmul.mubr.bf16.gmra.mrb[0].mxu0 %v479
        %v719 = vpop.f32.mrb[0].mxu0
        %v720 = vadd.f32 %v518, %v719
        %v721 = vpop.f32.mrb[0].mxu0
        %v722 = vadd.f32 %v522, %v721
        %v723 = vpop.f32.mrb[0].mxu0
        %v724 = vpop.f32.mrb[0].mxu0
        %725 = vdwg.mxu0
        %v726 = vmax.f32 %v720, 0.0
        %v727 = vmax.f32 %v722, 0.0
        %v728 = vpack.c.bf16 %v726, %v726
        %v729 = vpack.c.bf16 %v727, %v727
        %v730 = vld [vmem:[#allocation7] sm:$0xff]
        %v731 = vld [vmem:[#allocation7 + $0x8] sm:$0xff]
        %v732 = vld [vmem:[#allocation7 + $0x10] sm:$0xff]
        %v733 = vld [vmem:[#allocation7 + $0x18] sm:$0xff]
        %v734 = vld [vmem:[#allocation7 + $0x20] sm:$0xff]
        %v735 = vld [vmem:[#allocation7 + $0x28] sm:$0xff]
        %v736 = vld [vmem:[#allocation7 + $0x30] sm:$0xff]
        %v737 = vld [vmem:[#allocation7 + $0x38] sm:$0xff]
        %v738 = vld [vmem:[#allocation7 + $0x40] sm:$0xff]
        %v739 = vld [vmem:[#allocation7 + $0x48] sm:$0xff]
        %v740 = vld [vmem:[#allocation7 + $0x50] sm:$0xff]
        %v741 = vld [vmem:[#allocation7 + $0x58] sm:$0xff]
        %v742 = vld [vmem:[#allocation7 + $0x60] sm:$0xff]
        %v743 = vld [vmem:[#allocation7 + $0x68] sm:$0xff]
        %v744 = vld [vmem:[#allocation7 + $0x70] sm:$0xff]
        %v745 = vld [vmem:[#allocation7 + $0x78] sm:$0xff]
        %v746 = vld [vmem:[#allocation7 + $0x80] sm:$0xff]
        %v747 = vld [vmem:[#allocation7 + $0x88] sm:$0xff]
        %v748 = vld [vmem:[#allocation7 + $0x90] sm:$0xff]
        %v749 = vld [vmem:[#allocation7 + $0x98] sm:$0xff]
        %v750 = vld [vmem:[#allocation7 + $0xa0] sm:$0xff]
        %v751 = vld [vmem:[#allocation7 + $0xa8] sm:$0xff]
        %v752 = vld [vmem:[#allocation7 + $0xb0] sm:$0xff]
        %v753 = vld [vmem:[#allocation7 + $0xb8] sm:$0xff]
        %v754 = vld [vmem:[#allocation7 + $0xc0] sm:$0xff]
        %v755 = vld [vmem:[#allocation7 + $0xc8] sm:$0xff]
        %v756 = vld [vmem:[#allocation7 + $0xd0] sm:$0xff]
        %v757 = vld [vmem:[#allocation7 + $0xd8] sm:$0xff]
        %v758 = vld [vmem:[#allocation7 + $0xe0] sm:$0xff]
        %v759 = vld [vmem:[#allocation7 + $0xe8] sm:$0xff]
        %v760 = vld [vmem:[#allocation7 + $0xf0] sm:$0xff]
        %v761 = vld [vmem:[#allocation7 + $0xf8] sm:$0xff]
        %v762 = vld [vmem:[%s4] sm:$0x3]
        %v764 = vlaneseq
        %v765 = vshrl.u32 %v764, 7
        %v766 = vsub.s32 0, %v765
        %v767 = vrot.slane %v762, %v766
        %v768 = vlaneseq
        %v769 = vshrl.u32 %v768, 7
        %v770 = vsub.s32 1, %v769
        %v771 = vrot.slane %v762, %v770
        %v806 = vunpack.c.l.b16 %v730
        %v807 = vunpack.c.h.b16 %v730
        %v808 = vunpack.c.l.b16 %v731
        %v809 = vunpack.c.h.b16 %v731
        %v810 = vunpack.c.l.b16 %v732
        %v811 = vunpack.c.h.b16 %v732
        %v812 = vunpack.c.l.b16 %v733
        %v813 = vunpack.c.h.b16 %v733
        %v814 = vunpack.c.l.b16 %v734
        %v815 = vunpack.c.h.b16 %v734
        %v816 = vunpack.c.l.b16 %v735
        %v817 = vunpack.c.h.b16 %v735
        %v818 = vunpack.c.l.b16 %v736
        %v819 = vunpack.c.h.b16 %v736
        %v820 = vunpack.c.l.b16 %v737
        %v821 = vunpack.c.h.b16 %v737
        %v822 = vunpack.c.l.b16 %v738
        %v823 = vunpack.c.h.b16 %v738
        %v824 = vunpack.c.l.b16 %v739
        %v825 = vunpack.c.h.b16 %v739
        %v826 = vunpack.c.l.b16 %v740
        %v827 = vunpack.c.h.b16 %v740
        %v828 = vunpack.c.l.b16 %v741
        %v829 = vunpack.c.h.b16 %v741
        %v830 = vunpack.c.l.b16 %v742
        %v831 = vunpack.c.h.b16 %v742
        %v832 = vunpack.c.l.b16 %v743
        %v833 = vunpack.c.h.b16 %v743
        %v834 = vunpack.c.l.b16 %v744
        %v835 = vunpack.c.h.b16 %v744
        %v836 = vunpack.c.l.b16 %v745
        %v837 = vunpack.c.h.b16 %v745
        %v838 = vunpack.c.l.b16 %v746
        %v839 = vunpack.c.h.b16 %v746
        %v840 = vunpack.c.l.b16 %v747
        %v841 = vunpack.c.h.b16 %v747
        %v842 = vunpack.c.l.b16 %v748
        %v843 = vunpack.c.h.b16 %v748
        %v844 = vunpack.c.l.b16 %v749
        %v845 = vunpack.c.h.b16 %v749
        %v846 = vunpack.c.l.b16 %v750
        %v847 = vunpack.c.h.b16 %v750
        %v848 = vunpack.c.l.b16 %v751
        %v849 = vunpack.c.h.b16 %v751
        %v850 = vunpack.c.l.b16 %v752
        %v851 = vunpack.c.h.b16 %v752
        %v852 = vunpack.c.l.b16 %v753
        %v853 = vunpack.c.h.b16 %v753
        %v854 = vunpack.c.l.b16 %v754
        %v855 = vunpack.c.h.b16 %v754
        %v856 = vunpack.c.l.b16 %v755
        %v857 = vunpack.c.h.b16 %v755
        %v858 = vunpack.c.l.b16 %v756
        %v859 = vunpack.c.h.b16 %v756
        %v860 = vunpack.c.l.b16 %v757
        %v861 = vunpack.c.h.b16 %v757
        %v862 = vunpack.c.l.b16 %v758
        %v863 = vunpack.c.h.b16 %v758
        %v864 = vunpack.c.l.b16 %v759
        %v865 = vunpack.c.h.b16 %v759
        %v866 = vunpack.c.l.b16 %v760
        %v867 = vunpack.c.h.b16 %v760
        %v868 = vunpack.c.l.b16 %v761
        %v869 = vunpack.c.h.b16 %v761
        %v870 = vpack.c.b16 %v808, %v806
        %v871 = vpack.c.b16 %v809, %v807
        %v872 = vpack.c.b16 %v812, %v810
        %v873 = vpack.c.b16 %v813, %v811
        %v874 = vpack.c.b16 %v816, %v814
        %v875 = vpack.c.b16 %v817, %v815
        %v876 = vpack.c.b16 %v820, %v818
        %v877 = vpack.c.b16 %v821, %v819
        %v878 = vpack.c.b16 %v824, %v822
        %v879 = vpack.c.b16 %v825, %v823
        %v880 = vpack.c.b16 %v828, %v826
        %v881 = vpack.c.b16 %v829, %v827
        %v882 = vpack.c.b16 %v832, %v830
        %v883 = vpack.c.b16 %v833, %v831
        %v884 = vpack.c.b16 %v836, %v834
        %v885 = vpack.c.b16 %v837, %v835
        %v886 = vpack.c.b16 %v840, %v838
        %v887 = vpack.c.b16 %v841, %v839
        %v888 = vpack.c.b16 %v844, %v842
        %v889 = vpack.c.b16 %v845, %v843
        %v890 = vpack.c.b16 %v848, %v846
        %v891 = vpack.c.b16 %v849, %v847
        %v892 = vpack.c.b16 %v852, %v850
        %v893 = vpack.c.b16 %v853, %v851
        %v894 = vpack.c.b16 %v856, %v854
        %v895 = vpack.c.b16 %v857, %v855
        %v896 = vpack.c.b16 %v860, %v858
        %v897 = vpack.c.b16 %v861, %v859
        %v898 = vpack.c.b16 %v864, %v862
        %v899 = vpack.c.b16 %v865, %v863
        %v900 = vpack.c.b16 %v868, %v866
        %v901 = vpack.c.b16 %v869, %v867
        %934 = vmatprep.subr.bf16.mxu0 %v871
        %935 = vmatpush1.bf16.msra.mxu0 %v870
        %936 = vmatprep.subr.bf16.mxu0 %v873
        %937 = vmatpush1.bf16.msra.mxu0 %v872
        %938 = vmatprep.subr.bf16.mxu0 %v875
        %939 = vmatpush1.bf16.msra.mxu0 %v874
        %940 = vmatprep.subr.bf16.mxu0 %v877
        %941 = vmatpush1.bf16.msra.mxu0 %v876
        %942 = vmatprep.subr.bf16.mxu0 %v879
        %943 = vmatpush1.bf16.msra.mxu0 %v878
        %944 = vmatprep.subr.bf16.mxu0 %v881
        %945 = vmatpush1.bf16.msra.mxu0 %v880
        %946 = vmatprep.subr.bf16.mxu0 %v883
        %947 = vmatpush1.bf16.msra.mxu0 %v882
        %948 = vmatprep.subr.bf16.mxu0 %v885
        %949 = vmatpush1.bf16.msra.mxu0 %v884
        %950 = vmatprep.subr.bf16.mxu0 %v887
        %951 = vmatpush1.bf16.msra.mxu0 %v886
        %952 = vmatprep.subr.bf16.mxu0 %v889
        %953 = vmatpush1.bf16.msra.mxu0 %v888
        %954 = vmatprep.subr.bf16.mxu0 %v891
        %955 = vmatpush1.bf16.msra.mxu0 %v890
        %956 = vmatprep.subr.bf16.mxu0 %v893
        %957 = vmatpush1.bf16.msra.mxu0 %v892
        %958 = vmatprep.subr.bf16.mxu0 %v895
        %959 = vmatpush1.bf16.msra.mxu0 %v894
        %960 = vmatprep.subr.bf16.mxu0 %v897
        %961 = vmatpush1.bf16.msra.mxu0 %v896
        %962 = vmatprep.subr.bf16.mxu0 %v899
        %963 = vmatpush1.bf16.msra.mxu0 %v898
        %964 = vmatprep.subr.bf16.mxu0 %v901
        %965 = vmatpush1.bf16.msra.mxu0 %v900
        %966 = vmatprep.mubr.bf16.mxu0 %v729
        %967 = vmatmul.mubr.bf16.gmra.mrb[0].mxu0 %v728
        %v968 = vpop.f32.mrb[0].mxu0
        %v969 = vadd.f32 %v767, %v968
        %v970 = vpop.f32.mrb[0].mxu0
        %v971 = vadd.f32 %v771, %v970
        %v972 = vpop.f32.mrb[0].mxu0
        %v973 = vpop.f32.mrb[0].mxu0
        %974 = vdwg.mxu0
        %v975 = vmax.f32 %v969, 0.0
        %v976 = vmax.f32 %v971, 0.0
        %v977 = vpack.c.bf16 %v975, %v975
        %v978 = vpack.c.bf16 %v976, %v976
        %v979 = vld [vmem:[#allocation8] sm:$0xf]
        %v980 = vld [vmem:[#allocation8 + $0x4] sm:$0xf]
        %v981 = vld [vmem:[#allocation8 + $0x8] sm:$0xf]
        %v982 = vld [vmem:[#allocation8 + $0xc] sm:$0xf]
        %v983 = vld [vmem:[#allocation8 + $0x10] sm:$0xf]
        %v984 = vld [vmem:[#allocation8 + $0x14] sm:$0xf]
        %v985 = vld [vmem:[#allocation8 + $0x18] sm:$0xf]
        %v986 = vld [vmem:[#allocation8 + $0x1c] sm:$0xf]
        %v987 = vld [vmem:[#allocation8 + $0x20] sm:$0xf]
        %v988 = vld [vmem:[#allocation8 + $0x24] sm:$0xf]
        %v989 = vld [vmem:[#allocation8 + $0x28] sm:$0xf]
        %v990 = vld [vmem:[#allocation8 + $0x2c] sm:$0xf]
        %v991 = vld [vmem:[#allocation8 + $0x30] sm:$0xf]
        %v992 = vld [vmem:[#allocation8 + $0x34] sm:$0xf]
        %v993 = vld [vmem:[#allocation8 + $0x38] sm:$0xf]
        %v994 = vld [vmem:[#allocation8 + $0x3c] sm:$0xf]
        %v995 = vld [vmem:[#allocation8 + $0x40] sm:$0xf]
        %v996 = vld [vmem:[#allocation8 + $0x44] sm:$0xf]
        %v997 = vld [vmem:[#allocation8 + $0x48] sm:$0xf]
        %v998 = vld [vmem:[#allocation8 + $0x4c] sm:$0xf]
        %v999 = vld [vmem:[#allocation8 + $0x50] sm:$0xf]
        %v1000 = vld [vmem:[#allocation8 + $0x54] sm:$0xf]
        %v1001 = vld [vmem:[#allocation8 + $0x58] sm:$0xf]
        %v1002 = vld [vmem:[#allocation8 + $0x5c] sm:$0xf]
        %v1003 = vld [vmem:[#allocation8 + $0x60] sm:$0xf]
        %v1004 = vld [vmem:[#allocation8 + $0x64] sm:$0xf]
        %v1005 = vld [vmem:[#allocation8 + $0x68] sm:$0xf]
        %v1006 = vld [vmem:[#allocation8 + $0x6c] sm:$0xf]
        %v1007 = vld [vmem:[#allocation8 + $0x70] sm:$0xf]
        %v1008 = vld [vmem:[#allocation8 + $0x74] sm:$0xf]
        %v1009 = vld [vmem:[#allocation8 + $0x78] sm:$0xf]
        %v1010 = vld [vmem:[#allocation8 + $0x7c] sm:$0xf]
        %v1011 = vld [vmem:[%s6] sm:$0x1]
        %v1013 = vlaneseq
        %v1014 = vshrl.u32 %v1013, 7
        %v1015 = vsub.s32 0, %v1014
        %v1016 = vrot.slane %v1011, %v1015
        %v1050 = vunpack.c.l.b16 %v979
        %v1051 = vunpack.c.l.b16 %v980
        %v1052 = vunpack.c.l.b16 %v981
        %v1053 = vunpack.c.l.b16 %v982
        %v1054 = vunpack.c.l.b16 %v983
        %v1055 = vunpack.c.l.b16 %v984
        %v1056 = vunpack.c.l.b16 %v985
        %v1057 = vunpack.c.l.b16 %v986
        %v1058 = vunpack.c.l.b16 %v987
        %v1059 = vunpack.c.l.b16 %v988
        %v1060 = vunpack.c.l.b16 %v989
        %v1061 = vunpack.c.l.b16 %v990
        %v1062 = vunpack.c.l.b16 %v991
        %v1063 = vunpack.c.l.b16 %v992
        %v1064 = vunpack.c.l.b16 %v993
        %v1065 = vunpack.c.l.b16 %v994
        %v1066 = vunpack.c.l.b16 %v995
        %v1067 = vunpack.c.l.b16 %v996
        %v1068 = vunpack.c.l.b16 %v997
        %v1069 = vunpack.c.l.b16 %v998
        %v1070 = vunpack.c.l.b16 %v999
        %v1071 = vunpack.c.l.b16 %v1000
        %v1072 = vunpack.c.l.b16 %v1001
        %v1073 = vunpack.c.l.b16 %v1002
        %v1074 = vunpack.c.l.b16 %v1003
        %v1075 = vunpack.c.l.b16 %v1004
        %v1076 = vunpack.c.l.b16 %v1005
        %v1077 = vunpack.c.l.b16 %v1006
        %v1078 = vunpack.c.l.b16 %v1007
        %v1079 = vunpack.c.l.b16 %v1008
        %v1080 = vunpack.c.l.b16 %v1009
        %v1081 = vunpack.c.l.b16 %v1010
        %v1082 = vpack.c.b16 %v1051, %v1050
        %v1083 = vpack.c.b16 %v1053, %v1052
        %v1084 = vpack.c.b16 %v1055, %v1054
        %v1085 = vpack.c.b16 %v1057, %v1056
        %v1086 = vpack.c.b16 %v1059, %v1058
        %v1087 = vpack.c.b16 %v1061, %v1060
        %v1088 = vpack.c.b16 %v1063, %v1062
        %v1089 = vpack.c.b16 %v1065, %v1064
        %v1090 = vpack.c.b16 %v1067, %v1066
        %v1091 = vpack.c.b16 %v1069, %v1068
        %v1092 = vpack.c.b16 %v1071, %v1070
        %v1093 = vpack.c.b16 %v1073, %v1072
        %v1094 = vpack.c.b16 %v1075, %v1074
        %v1095 = vpack.c.b16 %v1077, %v1076
        %v1096 = vpack.c.b16 %v1079, %v1078
        %v1097 = vpack.c.b16 %v1081, %v1080
        %1114 = vmatprep.subr.bf16.mxu0 0
        %1115 = vmatpush1.bf16.msra.mxu0 %v1082
        %1116 = vmatprep.subr.bf16.mxu0 0
        %1117 = vmatpush1.bf16.msra.mxu0 %v1083
        %1118 = vmatprep.subr.bf16.mxu0 0
        %1119 = vmatpush1.bf16.msra.mxu0 %v1084
        %1120 = vmatprep.subr.bf16.mxu0 0
        %1121 = vmatpush1.bf16.msra.mxu0 %v1085
        %1122 = vmatprep.subr.bf16.mxu0 0
        %1123 = vmatpush1.bf16.msra.mxu0 %v1086
        %1124 = vmatprep.subr.bf16.mxu0 0
        %1125 = vmatpush1.bf16.msra.mxu0 %v1087
        %1126 = vmatprep.subr.bf16.mxu0 0
        %1127 = vmatpush1.bf16.msra.mxu0 %v1088
        %1128 = vmatprep.subr.bf16.mxu0 0
        %1129 = vmatpush1.bf16.msra.mxu0 %v1089
        %1130 = vmatprep.subr.bf16.mxu0 0
        %1131 = vmatpush1.bf16.msra.mxu0 %v1090
        %1132 = vmatprep.subr.bf16.mxu0 0
        %1133 = vmatpush1.bf16.msra.mxu0 %v1091
        %1134 = vmatprep.subr.bf16.mxu0 0
        %1135 = vmatpush1.bf16.msra.mxu0 %v1092
        %1136 = vmatprep.subr.bf16.mxu0 0
        %1137 = vmatpush1.bf16.msra.mxu0 %v1093
        %1138 = vmatprep.subr.bf16.mxu0 0
        %1139 = vmatpush1.bf16.msra.mxu0 %v1094
        %1140 = vmatprep.subr.bf16.mxu0 0
        %1141 = vmatpush1.bf16.msra.mxu0 %v1095
        %1142 = vmatprep.subr.bf16.mxu0 0
        %1143 = vmatpush1.bf16.msra.mxu0 %v1096
        %1144 = vmatprep.subr.bf16.mxu0 0
        %1145 = vmatpush1.bf16.msra.mxu0 %v1097
        %1146 = vmatprep.mubr.bf16.mxu0 %v978
        %1147 = vmatmul.mubr.bf16.gmra.mrb[0].mxu0 %v977
        %v1148 = vpop.f32.mrb[0].mxu0
        %v1149 = vadd.f32 %v1016, %v1148
        %v1150 = vpop.f32.mrb[0].mxu0
        %v1151 = vpop.f32.mrb[0].mxu0
        %v1152 = vpop.f32.mrb[0].mxu0
        %1153 = vdwg.mxu0
        %v1154 = vmax.f32 %v1149, 0.0
        %v1155 = vpack.c.bf16 %v1154, %v1154
        %v1156 = vld [vmem:[#allocation10] sm:$0xf]
        %v1157 = vld [vmem:[#allocation10 + $0x4] sm:$0xf]
        %v1158 = vld [vmem:[#allocation10 + $0x8] sm:$0xf]
        %v1159 = vld [vmem:[#allocation10 + $0xc] sm:$0xf]
        %v1160 = vld [vmem:[#allocation10 + $0x10] sm:$0xf]
        %v1161 = vld [vmem:[#allocation10 + $0x14] sm:$0xf]
        %v1162 = vld [vmem:[#allocation10 + $0x18] sm:$0xf]
        %v1163 = vld [vmem:[#allocation10 + $0x1c] sm:$0xf]
        %v1164 = vld [vmem:[#allocation10 + $0x20] sm:$0xf]
        %v1165 = vld [vmem:[#allocation10 + $0x24] sm:$0xf]
        %v1166 = vld [vmem:[#allocation10 + $0x28] sm:$0xf]
        %v1167 = vld [vmem:[#allocation10 + $0x2c] sm:$0xf]
        %v1168 = vld [vmem:[#allocation10 + $0x30] sm:$0xf]
        %v1169 = vld [vmem:[#allocation10 + $0x34] sm:$0xf]
        %v1170 = vld [vmem:[#allocation10 + $0x38] sm:$0xf]
        %v1171 = vld [vmem:[#allocation10 + $0x3c] sm:$0xf]
        %v1172 = vld [vmem:[%s8] sm:$0x1]
        %v1174 = vlaneseq
        %v1175 = vshrl.u32 %v1174, 7
        %v1176 = vsub.s32 0, %v1175
        %v1177 = vrot.slane %v1172, %v1176
        %v1195 = vunpack.c.l.b16 %v1156
        %v1196 = vunpack.c.l.b16 %v1157
        %v1197 = vunpack.c.l.b16 %v1158
        %v1198 = vunpack.c.l.b16 %v1159
        %v1199 = vunpack.c.l.b16 %v1160
        %v1200 = vunpack.c.l.b16 %v1161
        %v1201 = vunpack.c.l.b16 %v1162
        %v1202 = vunpack.c.l.b16 %v1163
        %v1203 = vunpack.c.l.b16 %v1164
        %v1204 = vunpack.c.l.b16 %v1165
        %v1205 = vunpack.c.l.b16 %v1166
        %v1206 = vunpack.c.l.b16 %v1167
        %v1207 = vunpack.c.l.b16 %v1168
        %v1208 = vunpack.c.l.b16 %v1169
        %v1209 = vunpack.c.l.b16 %v1170
        %v1210 = vunpack.c.l.b16 %v1171
        %v1211 = vpack.c.b16 %v1196, %v1195
        %v1212 = vpack.c.b16 %v1198, %v1197
        %v1213 = vpack.c.b16 %v1200, %v1199
        %v1214 = vpack.c.b16 %v1202, %v1201
        %v1215 = vpack.c.b16 %v1204, %v1203
        %v1216 = vpack.c.b16 %v1206, %v1205
        %v1217 = vpack.c.b16 %v1208, %v1207
        %v1218 = vpack.c.b16 %v1210, %v1209
        %1227 = vmatprep.subr.bf16.mxu0 0
        %1228 = vmatpush1.bf16.msra.mxu0 %v1211
        %1229 = vmatprep.subr.bf16.mxu0 0
        %1230 = vmatpush1.bf16.msra.mxu0 %v1212
        %1231 = vmatprep.subr.bf16.mxu0 0
        %1232 = vmatpush1.bf16.msra.mxu0 %v1213
        %1233 = vmatprep.subr.bf16.mxu0 0
        %1234 = vmatpush1.bf16.msra.mxu0 %v1214
        %1235 = vmatprep.subr.bf16.mxu0 0
        %1236 = vmatpush1.bf16.msra.mxu0 %v1215
        %1237 = vmatprep.subr.bf16.mxu0 0
        %1238 = vmatpush1.bf16.msra.mxu0 %v1216
        %1239 = vmatprep.subr.bf16.mxu0 0
        %1240 = vmatpush1.bf16.msra.mxu0 %v1217
        %1241 = vmatprep.subr.bf16.mxu0 0
        %1242 = vmatpush1.bf16.msra.mxu0 %v1218
        %1243 = vmatprep.subr.bf16.mxu0 0
        %1244 = vmatpush1.bf16.msra.mxu0 0
        %1245 = vmatprep.subr.bf16.mxu0 0
        %1246 = vmatpush1.bf16.msra.mxu0 0
        %1247 = vmatprep.subr.bf16.mxu0 0
        %1248 = vmatpush1.bf16.msra.mxu0 0
        %1249 = vmatprep.subr.bf16.mxu0 0
        %1250 = vmatpush1.bf16.msra.mxu0 0
        %1251 = vmatprep.subr.bf16.mxu0 0
        %1252 = vmatpush1.bf16.msra.mxu0 0
        %1253 = vmatprep.subr.bf16.mxu0 0
        %1254 = vmatpush1.bf16.msra.mxu0 0
        %1255 = vmatprep.subr.bf16.mxu0 0
        %1256 = vmatpush1.bf16.msra.mxu0 0
        %1257 = vmatprep.subr.bf16.mxu0 0
        %1258 = vmatpush1.bf16.msra.mxu0 0
        %1259 = vmatprep.mubr.bf16.mxu0 0
        %1260 = vmatmul.mubr.bf16.gmra.mrb[0].mxu0 %v1155
        %v1261 = vpop.f32.mrb[0].mxu0
        %v1262 = vadd.f32 %v1177, %v1261
        %v1263 = vpop.f32.mrb[0].mxu0
        %v1264 = vpop.f32.mrb[0].mxu0
        %v1265 = vpop.f32.mrb[0].mxu0
        %1266 = vdwg.mxu0
        %v1267 = vmax.f32 %v1262, 0.0
        %v1268 = vpack.c.bf16 %v1267, %v1267
        %v1269 = vld [vmem:[#allocation11] sm:$0xf]
        %v1270 = vld [vmem:[#allocation11 + $0x4] sm:$0xf]
        %v1271 = vld [vmem:[#allocation11 + $0x8] sm:$0xf]
        %v1272 = vld [vmem:[#allocation11 + $0xc] sm:$0xf]
        %v1273 = vld [vmem:[#allocation11 + $0x10] sm:$0xf]
        %v1274 = vld [vmem:[#allocation11 + $0x14] sm:$0xf]
        %v1275 = vld [vmem:[#allocation11 + $0x18] sm:$0xf]
        %v1276 = vld [vmem:[#allocation11 + $0x1c] sm:$0xf]
        %v1277 = vld [vmem:[#allocation11 + $0x20] sm:$0xf]
        %v1278 = vld [vmem:[#allocation11 + $0x24] sm:$0xf]
        %v1279 = vld [vmem:[#allocation11 + $0x28] sm:$0xf]
        %v1280 = vld [vmem:[#allocation11 + $0x2c] sm:$0xf]
        %v1281 = vld [vmem:[#allocation11 + $0x30] sm:$0xf]
        %v1282 = vld [vmem:[#allocation11 + $0x34] sm:$0xf]
        %v1283 = vld [vmem:[#allocation11 + $0x38] sm:$0xf]
        %v1284 = vld [vmem:[#allocation11 + $0x3c] sm:$0xf]
        %v1285 = vld [vmem:[%s10] sm:$0x1]
        %v1287 = vlaneseq
        %v1288 = vshrl.u32 %v1287, 7
        %v1289 = vsub.s32 0, %v1288
        %v1290 = vrot.slane %v1285, %v1289
        %v1308 = vunpack.c.l.b16 %v1269
        %v1309 = vunpack.c.l.b16 %v1270
        %v1310 = vunpack.c.l.b16 %v1271
        %v1311 = vunpack.c.l.b16 %v1272
        %v1312 = vunpack.c.l.b16 %v1273
        %v1313 = vunpack.c.l.b16 %v1274
        %v1314 = vunpack.c.l.b16 %v1275
        %v1315 = vunpack.c.l.b16 %v1276
        %v1316 = vunpack.c.l.b16 %v1277
        %v1317 = vunpack.c.l.b16 %v1278
        %v1318 = vunpack.c.l.b16 %v1279
        %v1319 = vunpack.c.l.b16 %v1280
        %v1320 = vunpack.c.l.b16 %v1281
        %v1321 = vunpack.c.l.b16 %v1282
        %v1322 = vunpack.c.l.b16 %v1283
        %v1323 = vunpack.c.l.b16 %v1284
        %v1324 = vpack.c.b16 %v1309, %v1308
        %v1325 = vpack.c.b16 %v1311, %v1310
        %v1326 = vpack.c.b16 %v1313, %v1312
        %v1327 = vpack.c.b16 %v1315, %v1314
        %v1328 = vpack.c.b16 %v1317, %v1316
        %v1329 = vpack.c.b16 %v1319, %v1318
        %v1330 = vpack.c.b16 %v1321, %v1320
        %v1331 = vpack.c.b16 %v1323, %v1322
        %1340 = vmatprep.subr.bf16.mxu0 0
        %1341 = vmatpush1.bf16.msra.mxu0 %v1324
        %1342 = vmatprep.subr.bf16.mxu0 0
        %1343 = vmatpush1.bf16.msra.mxu0 %v1325
        %1344 = vmatprep.subr.bf16.mxu0 0
        %1345 = vmatpush1.bf16.msra.mxu0 %v1326
        %1346 = vmatprep.subr.bf16.mxu0 0
        %1347 = vmatpush1.bf16.msra.mxu0 %v1327
        %1348 = vmatprep.subr.bf16.mxu0 0
        %1349 = vmatpush1.bf16.msra.mxu0 %v1328
        %1350 = vmatprep.subr.bf16.mxu0 0
        %1351 = vmatpush1.bf16.msra.mxu0 %v1329
        %1352 = vmatprep.subr.bf16.mxu0 0
        %1353 = vmatpush1.bf16.msra.mxu0 %v1330
        %1354 = vmatprep.subr.bf16.mxu0 0
        %1355 = vmatpush1.bf16.msra.mxu0 %v1331
        %1356 = vmatprep.subr.bf16.mxu0 0
        %1357 = vmatpush1.bf16.msra.mxu0 0
        %1358 = vmatprep.subr.bf16.mxu0 0
        %1359 = vmatpush1.bf16.msra.mxu0 0
        %1360 = vmatprep.subr.bf16.mxu0 0
        %1361 = vmatpush1.bf16.msra.mxu0 0
        %1362 = vmatprep.subr.bf16.mxu0 0
        %1363 = vmatpush1.bf16.msra.mxu0 0
        %1364 = vmatprep.subr.bf16.mxu0 0
        %1365 = vmatpush1.bf16.msra.mxu0 0
        %1366 = vmatprep.subr.bf16.mxu0 0
        %1367 = vmatpush1.bf16.msra.mxu0 0
        %1368 = vmatprep.subr.bf16.mxu0 0
        %1369 = vmatpush1.bf16.msra.mxu0 0
        %1370 = vmatprep.subr.bf16.mxu0 0
        %1371 = vmatpush1.bf16.msra.mxu0 0
        %1372 = vmatprep.mubr.bf16.mxu0 0
        %1373 = vmatmul.mubr.bf16.gmra.mrb[0].mxu0 %v1268
        %v1374 = vpop.f32.mrb[0].mxu0
        %v1375 = vadd.f32 %v1290, %v1374
        %v1376 = vpop.f32.mrb[0].mxu0
        %v1377 = vpop.f32.mrb[0].mxu0
        %v1378 = vpop.f32.mrb[0].mxu0
        %1379 = vdwg.mxu0
        %1380 = vst [vmem:[%s475] sm:$0xff] %v1375
        %s1381 = sand.u32 %s275, 1
        %s1382 = scalar_lea.sflag [#allocation4], %s1381
        %s1383 = sand.u32 %s275, 1
        %s1384 = smul.addr %s1383, 8
        %s1385 = scalar_lea.vmem [#allocation13], %s1384
        // Predicated region
        $region89: #{tpu_custom_call.1} parent=63 // pred_check
          %p1386 = pneg %p285
        $region90: #{tpu_custom_call.1} parent=63 // pred_check_branch
          %1388 = sbr.rel (%p1386) target = $region92
        $region91: #{tpu_custom_call.1} parent=63 // pred_region
          %s1390 = ssub.s32 128, 128
          %1391 = vsyncadd %s1382, %s1390
          %s1392 = smul.addr %s31, 128
          %s1393 = scalar_lea.hbm %s11, %s1392
          %s1395 = sshll.u32 %s1385, 4
          %s1396 = int_to_ptr.vmem [resolvable:$true] %s1395
          %1398 = dma.vmem_to_hbm [thread:$0]  %s1396, 128, %s1393, %s1382
        $region92: #{tpu_custom_call.1} parent=63 // pred_fallthru
          _
      $region64: #{tpu_custom_call.1} parent=5 // pred_fallthru
        _
      %p1399 = scmp.le.s32.totalorder 2, %s26
      // Predicated region
      $region93: #{tpu_custom_call.1} parent=5 // pred_check
        %p1400 = pneg %p1399
      $region94: #{tpu_custom_call.1} parent=5 // pred_check_branch
        %1402 = sbr.rel (%p1400) target = $region96
      $region95: #{tpu_custom_call.1} parent=5 // pred_region
        %s1403 = ssub.s32 %s26, 2
        // Predicated region
        $region97: #{tpu_custom_call.1} parent=95 // pred_check
          %p1404 = pneg %p291
        $region98: #{tpu_custom_call.1} parent=95 // pred_check_branch
          %1406 = sbr.rel (%p1404) target = $region100
        $region99: #{tpu_custom_call.1} parent=95 // pred_region
          %s1407 = sand.u32 %s276, 1
          %s1408 = scalar_lea.sflag [#allocation4], %s1407
          %s1409 = sand.u32 %s276, 1
          %s1410 = smul.addr %s1409, 8
          %s1411 = scalar_lea.vmem [#allocation13], %s1410
          %1412 = dma.done %s1408, 128
        $region100: #{tpu_custom_call.1} parent=95 // pred_fallthru
          _
      $region96: #{tpu_custom_call.1} parent=5 // pred_fallthru
        _
    $region6: #{tpu_custom_call.1} parent=1 // loop_footer
      %s30 = sadd.s32 1, %s26
    $region7: #{tpu_custom_call.1} parent=1 // loop_footer_branch
      %25 = sbr.rel target = $region3
    $region8: #{tpu_custom_call.1} parent=1 // loop_exit
      _
    %1413 = vsyncpa [#allocation3], 1
    %s1414 = scalar_lea.sflag [#allocation3], 1
    %1415 = vsyncpa %s1414, 1
    %1416 = vsyncpa [#allocation6], 1
    %1417 = vsyncpa [#allocation9], 1
    %1418 = vsyncpa [#allocation12], 1
    %1419 = vsyncpa [#allocation4], 1
    %s1420 = scalar_lea.sflag [#allocation4], 1
    %1421 = vsyncpa %s1420, 1

</llo_original>
